<compile_context>
chip_gen: v6e
topology: v6e:2x2x1
jax: 0.10.0
libtpu: 0.0.40
codegen_flags: <defaults>
</compile_context>

<pallas_src>
import jax
import jax.numpy as jnp
from jax.experimental import pallas as pl
from jax.experimental.pallas import tpu as pltpu


def _planar_flow_kernel(w_ref, b_ref, wu_ref, u_ref, z_ref, out_ref):
    """One tile of TILE_N samples, batch on lanes.

    w_ref  : SMEM (d,)      flow parameter w
    b_ref  : SMEM (1,)      bias
    wu_ref : SMEM (1,)      precomputed sum(w * u)  (grid-invariant)
    u_ref  : VMEM (d, 1)    flow parameter u as a column (for broadcasting)
    z_ref  : VMEM (d, TILE_N)
    out_ref: VMEM (d+1, TILE_N)   rows 0..d-1 = f_z, row d = log|det|
    """
    d = z_ref.shape[0]

    z = z_ref[...].astype(jnp.float32)                       # (d, T)

    # arg = z @ w.T + b  -- d-contraction unrolled over sublane rows (VPU only).
    arg = z[0:1, :] * w_ref[0] + b_ref[0]                    # (1, T)
    for k in range(1, d):
        arg = arg + z[k:k + 1, :] * w_ref[k]
    t = jnp.tanh(arg)                                        # (1, T)  EUP

    # f_z = z + u * tanh(arg)   -- one broadcasted expression, (d,1)*(1,T).
    u_col = u_ref[...].astype(jnp.float32)                   # (d, 1)
    fz = z + u_col * t                                       # (d, T)

    # log|1 + psi @ u.T| == log|1 + (1 - tanh(arg)^2) * (w . u)|
    ld = jnp.log(jnp.abs(1.0 + (1.0 - t * t) * wu_ref[0]))   # (1, T)

    out_ref[pl.ds(0, d), :] = fz.astype(out_ref.dtype)
    out_ref[pl.ds(d, 1), :] = ld.astype(out_ref.dtype)


def _pick_tile(n, requested):
    """Pick a lane-tile size: large (amortize per-step overhead) but keep >= 4
    grid steps when the batch allows so the "parallel" axis shards across TCs."""
    lanes = 128 * pl.cdiv(n, 128)
    tile = 16384 if requested is None else int(requested)
    tile = max(128, (tile // 128) * 128)
    if lanes >= 4 * 128:
        cap = max(128, ((lanes // 4) // 128) * 128)
        tile = min(tile, cap)
    return min(tile, lanes)


def planar_flow_t(z_t, w, u, b, *, tile_n=None):
    """PlanarFlow on a batch-on-lanes latent z_t of shape (d, N).

    This is the copy-free entry point (no wrapper-side layout shuffles).
    Returns (f_z_t of shape (d, N) in z_t.dtype, logdet of shape (N,) float32).
    """
    z_t = jnp.asarray(z_t)
    d, n = z_t.shape

    w = jnp.asarray(w, jnp.float32).reshape(-1)              # (d,)
    u = jnp.asarray(u, jnp.float32).reshape(-1)              # (d,)
    b1 = jnp.asarray(b, jnp.float32).reshape(-1)[:1]         # (1,)
    wu = jnp.sum(w * u).reshape(1)                           # (1,)  grid-invariant
    u_col = u.reshape(d, 1)                                  # (d, 1)  VMEM column

    tile_n = _pick_tile(n, tile_n)
    num_tiles = pl.cdiv(n, tile_n)

    out = pl.pallas_call(
        _planar_flow_kernel,
        out_shape=jax.ShapeDtypeStruct((d + 1, n), z_t.dtype),
        grid=(num_tiles,),
        in_specs=[
            pl.BlockSpec(memory_space=pltpu.MemorySpace.SMEM),   # w    (d,)
            pl.BlockSpec(memory_space=pltpu.MemorySpace.SMEM),   # b    (1,)
            pl.BlockSpec(memory_space=pltpu.MemorySpace.SMEM),   # w.u  (1,)
            pl.BlockSpec((d, 1), lambda i: (0, 0)),              # u column
            pl.BlockSpec((d, tile_n), lambda i: (0, i)),         # z tile (ragged last)
        ],
        out_specs=pl.BlockSpec((d + 1, tile_n), lambda i: (0, i)),  # fused f_z + logdet
        compiler_params=pltpu.CompilerParams(
            dimension_semantics=("parallel",),                   # megacore on v7x
        ),
    )(w, b1, wu, u_col, z_t)

    f_z_t = out[:d, :]
    logdet = out[d, :].astype(jnp.float32)
    return f_z_t, logdet


def planar_flow(z, w, u, b, *, tile_n=None):
    """(N, d) API matching the PyTorch module. z: (N, d); w, u: (1, d); b: (1,).

    Returns (f_z of shape (N, d) in z.dtype, logdet of shape (N,) float32).
    The only wrapper copies are the layout transposes at the API boundary;
    keep latents batch-on-lanes and call planar_flow_t to avoid them entirely.
    """
    z = jnp.asarray(z)
    f_z_t, logdet = planar_flow_t(z.T, w, u, b, tile_n=tile_n)
    return f_z_t.T, logdet


def planar_flow_ref(z, w, u, b):
    """Pure-JAX reference matching the PyTorch forward exactly."""
    z = jnp.asarray(z, jnp.float32)
    arg = z @ w.T + b                                        # (N, 1)
    t = jnp.tanh(arg)
    f_z = z + u * t
    psi = w * (1.0 - t * t)
    logdet = jnp.log(jnp.abs(1.0 + psi @ u.T)).squeeze()
    return f_z, logdet


if __name__ == "__main__":
    d = 3
    N = 300            # not a multiple of 128 -> exercises the ragged last block
    init_sigma = 0.01

    key = jax.random.PRNGKey(0)
    k_u, k_w, k_z = jax.random.split(key, 3)

    # Deterministic parameter init, same shapes/statistics as the module.
    u = init_sigma * jax.random.normal(k_u, (1, d), jnp.float32)
    w = init_sigma * jax.random.normal(k_w, (1, d), jnp.float32)
    b = jnp.zeros((1,), jnp.float32)

    z = jax.random.normal(k_z, (N, d), jnp.float32)

    f_ref, ld_ref = planar_flow_ref(z, w, u, b)

    # Default (single large tile for this tiny demo batch).
    f_z, logdet = planar_flow(z, w, u, b)
    jax.block_until_ready((f_z, logdet))
    assert f_z.shape == (N, d) and logdet.shape == (N,)
    assert jnp.allclose(f_z, f_ref, atol=1e-5, rtol=1e-5)
    assert jnp.allclose(logdet, ld_ref, atol=1e-5, rtol=1e-5)

    # Small tile -> multiple grid steps + ragged last block.
    f_z2, logdet2 = planar_flow(z, w, u, b, tile_n=128)
    jax.block_until_ready((f_z2, logdet2))
    assert jnp.allclose(f_z2, f_ref, atol=1e-5, rtol=1e-5)
    assert jnp.allclose(logdet2, ld_ref, atol=1e-5, rtol=1e-5)

    print("KERNEL_OK")
</pallas_src>

<mosaic_0001>
module attributes {stable_mosaic.version = 11 : i64} {
  func.func @_planar_flow_kernel(%arg0: i32, %arg1: memref<3xf32, #tpu.memory_space<smem>>, %arg2: memref<1xf32, #tpu.memory_space<smem>>, %arg3: memref<1xf32, #tpu.memory_space<smem>>, %arg4: memref<3x1xf32, #tpu.memory_space<vmem>>, %arg5: memref<3x384xf32, #tpu.memory_space<vmem>>, %arg6: memref<4x384xf32, #tpu.memory_space<vmem>>) attributes {dimension_semantics = [#tpu.dimension_semantics<parallel>], iteration_bounds = array<i64: 1>, scalar_prefetch = 0 : i64, scratch_operands = 0 : i64, tpu.core_type = #tpu.core_type<tc>, window_params = [{transform_indices = @transform_0, window_bounds = array<i64: 3>}, {transform_indices = @transform_1, window_bounds = array<i64: 1>}, {transform_indices = @transform_2, window_bounds = array<i64: 1>}, {pipeline_mode = #tpu.pipeline_mode<synchronous>, transform_indices = @transform_3, window_bounds = array<i64: 3, 1>}, {transform_indices = @transform_4, window_bounds = array<i64: 3, 384>}, {transform_indices = @transform_5, window_bounds = array<i64: 4, 384>}]} {
    %c0 = arith.constant 0 : index
    %c0_0 = arith.constant 0 : index
    %0 = vector.load %arg5[%c0, %c0_0] : memref<3x384xf32, #tpu.memory_space<vmem>>, vector<3x384xf32>
    %1 = vector.extract_strided_slice %0 {offsets = [0, 0], sizes = [1, 384], strides = [1, 1]} : vector<3x384xf32> to vector<1x384xf32>
    %c0_1 = arith.constant 0 : index
    %2 = memref.load %arg1[%c0_1] : memref<3xf32, #tpu.memory_space<smem>>
    %3 = vector.broadcast %2 : f32 to vector<1x384xf32>
    %4 = arith.mulf %1, %3 : vector<1x384xf32>
    %c0_2 = arith.constant 0 : index
    %5 = memref.load %arg2[%c0_2] : memref<1xf32, #tpu.memory_space<smem>>
    %6 = vector.broadcast %5 : f32 to vector<1x384xf32>
    %7 = arith.addf %4, %6 : vector<1x384xf32>
    %8 = vector.extract_strided_slice %0 {offsets = [1, 0], sizes = [1, 384], strides = [1, 1]} : vector<3x384xf32> to vector<1x384xf32>
    %c1 = arith.constant 1 : index
    %9 = memref.load %arg1[%c1] : memref<3xf32, #tpu.memory_space<smem>>
    %10 = vector.broadcast %9 : f32 to vector<1x384xf32>
    %11 = arith.mulf %8, %10 : vector<1x384xf32>
    %12 = arith.addf %7, %11 : vector<1x384xf32>
    %13 = vector.extract_strided_slice %0 {offsets = [2, 0], sizes = [1, 384], strides = [1, 1]} : vector<3x384xf32> to vector<1x384xf32>
    %c2 = arith.constant 2 : index
    %14 = memref.load %arg1[%c2] : memref<3xf32, #tpu.memory_space<smem>>
    %15 = vector.broadcast %14 : f32 to vector<1x384xf32>
    %16 = arith.mulf %13, %15 : vector<1x384xf32>
    %17 = arith.addf %12, %16 : vector<1x384xf32>
    %18 = math.tanh %17 : vector<1x384xf32>
    %c0_3 = arith.constant 0 : index
    %c0_4 = arith.constant 0 : index
    %19 = vector.load %arg4[%c0_3, %c0_4] : memref<3x1xf32, #tpu.memory_space<vmem>>, vector<3x1xf32>
    %20 = vector.broadcast %19 : vector<3x1xf32> to vector<3x384xf32>
    %21 = vector.broadcast %18 : vector<1x384xf32> to vector<3x384xf32>
    %22 = arith.mulf %20, %21 : vector<3x384xf32>
    %23 = arith.addf %0, %22 : vector<3x384xf32>
    %24 = arith.mulf %18, %18 : vector<1x384xf32>
    %cst = arith.constant 1.000000e+00 : f32
    %25 = vector.broadcast %cst : f32 to vector<1x384xf32>
    %26 = arith.subf %25, %24 : vector<1x384xf32>
    %c0_5 = arith.constant 0 : index
    %27 = memref.load %arg3[%c0_5] : memref<1xf32, #tpu.memory_space<smem>>
    %28 = vector.broadcast %27 : f32 to vector<1x384xf32>
    %29 = arith.mulf %26, %28 : vector<1x384xf32>
    %cst_6 = arith.constant 1.000000e+00 : f32
    %30 = vector.broadcast %cst_6 : f32 to vector<1x384xf32>
    %31 = arith.addf %30, %29 : vector<1x384xf32>
    %32 = math.absf %31 : vector<1x384xf32>
    %33 = math.log %32 : vector<1x384xf32>
    %c0_7 = arith.constant 0 : index
    %c0_8 = arith.constant 0 : index
    %34 = vector.load %arg6[%c0_7, %c0_8] : memref<4x384xf32, #tpu.memory_space<vmem>>, vector<3x384xf32>
    tpu.vector_store %arg6[%c0_7, %c0_8], %23 {strides = array<i32>} : memref<4x384xf32, #tpu.memory_space<vmem>>, vector<3x384xf32>,
    %c3 = arith.constant 3 : index
    %c0_9 = arith.constant 0 : index
    %35 = vector.load %arg6[%c3, %c0_9] : memref<4x384xf32, #tpu.memory_space<vmem>>, vector<1x384xf32>
    tpu.vector_store %arg6[%c3, %c0_9], %33 {strides = array<i32>} : memref<4x384xf32, #tpu.memory_space<vmem>>, vector<1x384xf32>,
    return
  }
  func.func @transform_0(%arg0: i32) -> i32 {
    %c0_i32 = arith.constant 0 : i32
    %c0_i32_0 = arith.constant 0 : i32
    return %c0_i32 : i32
  }
  func.func @transform_1(%arg0: i32) -> i32 {
    %c0_i32 = arith.constant 0 : i32
    %c0_i32_0 = arith.constant 0 : i32
    return %c0_i32 : i32
  }
  func.func @transform_2(%arg0: i32) -> i32 {
    %c0_i32 = arith.constant 0 : i32
    %c0_i32_0 = arith.constant 0 : i32
    return %c0_i32 : i32
  }
  func.func @transform_3(%arg0: i32) -> (i32, i32) {
    %c0_i32 = arith.constant 0 : i32
    %c0_i32_0 = arith.constant 0 : i32
    %c0_i32_1 = arith.constant 0 : i32
    return %c0_i32, %c0_i32_0 : i32, i32
  }
  func.func @transform_4(%arg0: i32) -> (i32, i32) {
    %c0_i32 = arith.constant 0 : i32
    %c0_i32_0 = arith.constant 0 : i32
    return %c0_i32, %arg0 : i32, i32
  }
  func.func @transform_5(%arg0: i32) -> (i32, i32) {
    %c0_i32 = arith.constant 0 : i32
    %c0_i32_0 = arith.constant 0 : i32
    return %c0_i32, %arg0 : i32, i32
  }
}

</mosaic_0001>

<llo_original>
// kernel: tpu_custom_call.1
$region0: #{tpu_custom_call.1}
  #allocation0 [shape = 'u32[]', space=smem, size = 0x4, offset = 0x4, fixed_abs, tag = 'smem constant byte address 0x4 - core index']
  #allocation1 [shape = 'u32[144,128]{1,0:T(1,128)}', space=vmem, size = 0x12000, scoped, tag = 'internal scratch']
  #allocation2 [shape = 'f32[1]{0:T(128)S(6)}', space=smem, size = 0x200, scoped, tag = 'scoped memory for tpu_custom_call.1']
  #allocation3 [shape = 'f32[1]{0:T(128)S(6)}', space=smem, size = 0x200, scoped, tag = 'scoped memory for tpu_custom_call.1']
  %s0 = inlined_call_operand.hbm [shape: f32[3], index: 0, kind: input, shape index: {}]
  %s1 = inlined_call_operand.<no memory space> [shape: f32[1], index: 1, kind: input, shape index: {}]
  %s2 = inlined_call_operand.<no memory space> [shape: f32[1], index: 2, kind: input, shape index: {}]
  %s3 = inlined_call_operand.vmem [shape: f32[3,1], index: 3, kind: input, shape index: {}]
  %s4 = inlined_call_operand.vmem [shape: f32[3,300], index: 4, kind: input, shape index: {}]
  %s5 = inlined_call_operand.hbm [shape: f32[4,300], index: 5, kind: output, shape index: {}]
  %s6 = sld [smem:[#allocation0]]
  $region34: #{tpu_custom_call.1} parent=0
    _
  %s8 = ssub.s32 1, %s6
  %s9 = scalar_select 0, %s8, %s6
  %10 = sst [smem:[#allocation2]] %s1
  %11 = sst [smem:[#allocation3]] %s2
  $region1: #{tpu_custom_call.1} parent=0
    #allocation4 [shape = 'u8[512]{0}', space=smem, size = 0x200, scoped, tag = 'input window, operand 0, single buffered']
    #allocation5 [shape = 's32[1]{0}', space=sflag, size = 0x4, scoped, tag = 'scoped memory for tpu_custom_call.1']
    #allocation6 [shape = 's32[1]{0}', space=sflag, size = 0x4, scoped, tag = 'scoped memory for tpu_custom_call.1']
    #allocation7 [shape = 'u8[6144]{0}', space=vmem, size = 0x1800, scoped, tag = 'output window, operand 0, single buffered']
    %12 = vsyncpa [#allocation6], 0
    %13 = vsyncpa [#allocation5], 0
    // Predicated region
    $region2: #{tpu_custom_call.1} parent=1 // pred_check
      _
    $region3: #{tpu_custom_call.1} parent=1 // pred_check_branch
      %15 = sbr.rel (0) target = $region5
    $region4: #{tpu_custom_call.1} parent=1 // pred_region
      %s17 = ssub.s32 16, 16
      %18 = vsyncadd [#allocation6], %s17
      %21 = dma.hbm_to_smem %s0, 16, [#allocation4], [#allocation6]
    $region5: #{tpu_custom_call.1} parent=1 // pred_fallthru
      _
    // Predicated region
    $region6: #{tpu_custom_call.1} parent=1 // pred_check
      _
    $region7: #{tpu_custom_call.1} parent=1 // pred_check_branch
      %23 = sbr.rel (0) target = $region9
    $region8: #{tpu_custom_call.1} parent=1 // pred_region
      _
    $region9: #{tpu_custom_call.1} parent=1 // pred_fallthru
      _
    // Predicated region
    $region10: #{tpu_custom_call.1} parent=1 // pred_check
      _
    $region11: #{tpu_custom_call.1} parent=1 // pred_check_branch
      %25 = sbr.rel (0) target = $region13
    $region12: #{tpu_custom_call.1} parent=1 // pred_region
      _
    $region13: #{tpu_custom_call.1} parent=1 // pred_fallthru
      _
    // Predicated region
    $region14: #{tpu_custom_call.1} parent=1 // pred_check
      _
    $region15: #{tpu_custom_call.1} parent=1 // pred_check_branch
      %27 = sbr.rel (0) target = $region17
    $region16: #{tpu_custom_call.1} parent=1 // pred_region
      _
    $region17: #{tpu_custom_call.1} parent=1 // pred_fallthru
      _
    // Predicated region
    $region18: #{tpu_custom_call.1} parent=1 // pred_check
      _
    $region19: #{tpu_custom_call.1} parent=1 // pred_check_branch
      %29 = sbr.rel (0) target = $region21
    $region20: #{tpu_custom_call.1} parent=1 // pred_region
      _
    $region21: #{tpu_custom_call.1} parent=1 // pred_fallthru
      _
    // Predicated region
    $region22: #{tpu_custom_call.1} parent=1 // pred_check
      _
    $region23: #{tpu_custom_call.1} parent=1 // pred_check_branch
      %31 = sbr.rel (0) target = $region25
    $region24: #{tpu_custom_call.1} parent=1 // pred_region
      %32 = dma.done [#allocation6], 16
    $region25: #{tpu_custom_call.1} parent=1 // pred_fallthru
      _
    %33 = sfence
    %v34 = vld [vmem:[%s4] sm:$0x77]
    %v35 = vld [vmem:[%s4 + $0x8] sm:$0x7]
    %s36 = sld [smem:[#allocation4]]
    %v37 = vstv %s36
    %v38 = vmul.f32 %v34, %v37
    %v39 = vmul.f32 %v35, %v37
    %s40 = sld [smem:[#allocation2]]
    %v41 = vstv %s40
    %v42 = vadd.f32 %v38, %v41
    %v43 = vadd.f32 %v39, %v41
    %s44 = sld [smem:[#allocation4 + $0x1]]
    %v45 = vstv %s44
    %v46 = vmul.f32 %v34, %v45
    %v47 = vmul.f32 %v35, %v45
    %v50 = vrot.slane %v46, 5
    %v51 = vrot.slane %v50, 4
    %v52 = vrot.slane %v47, 5
    %v53 = vrot.slane %v52, 4
    %v56 = vadd.f32 %v42, %v51
    %v57 = vadd.f32 %v43, %v53
    %s58 = sld [smem:[#allocation4 + $0x2]]
    %v59 = vstv %s58
    %v60 = vmul.f32 %v34, %v59
    %v61 = vmul.f32 %v35, %v59
    %v64 = vrot.slane %v60, 6
    %v65 = vrot.slane %v64, 4
    %v66 = vrot.slane %v61, 6
    %v67 = vrot.slane %v66, 4
    %v70 = vadd.f32 %v56, %v65
    %v71 = vadd.f32 %v57, %v67
    %v72 = vtanh.pop %v70
    %v73 = vtanh.pop %v71
    %v74 = vld [vmem:[%s3] sm:$0x7]
    %76 = vset.pattern.permute.xlu0 0
    %77 = vperm.xlu0 %76, %v74
    %v78 = vpop.permute.xlu0 %77
    %v82 = vlaneseq
    %v83 = vshrl.u32 %v82, 7
    %v84 = vsub.s32 0, %v83
    %v85 = vrot.slane %v72, %v84
    %v86 = vlaneseq
    %v87 = vshrl.u32 %v86, 7
    %v88 = vsub.s32 4, %v87
    %v89 = vrot.slane %v72, %v88
    %v90 = vlaneseq
    %v91 = vshrl.u32 %v90, 7
    %v92 = vsub.s32 0, %v91
    %v93 = vrot.slane %v73, %v92
    %v97 = vlaneseq
    %v98 = vshrl.u32 %v97, 7
    %v99 = vsub.s32 0, %v98
    %v100 = vrot.slane %v85, %v99
    %v101 = vlaneseq
    %v102 = vshrl.u32 %v101, 7
    %v103 = vsub.s32 0, %v102
    %v104 = vrot.slane %v89, %v103
    %v105 = vlaneseq
    %v106 = vshrl.u32 %v105, 7
    %v107 = vsub.s32 0, %v106
    %v108 = vrot.slane %v93, %v107
    %v109 = vmul.f32 %v78, %v100
    %v110 = vmul.f32 %v78, %v104
    %v111 = vmul.f32 %v78, %v108
    %v114 = vcombine.low %v109, %v110
    %v116 = vadd.f32 %v34, %v114
    %v117 = vadd.f32 %v35, %v111
    %v118 = vmul.f32 %v72, %v72
    %v119 = vmul.f32 %v73, %v73
    %v120 = vsub.f32 1.0, %v118
    %v121 = vsub.f32 1.0, %v119
    %s122 = sld [smem:[#allocation3]]
    %v123 = vstv %s122
    %v124 = vmul.f32 %v120, %v123
    %v125 = vmul.f32 %v121, %v123
    %v126 = vadd.f32 %v124, 1.0
    %v127 = vadd.f32 %v125, 1.0
    %v128 = vand.u32 2147483647, %v126
    %v129 = vand.u32 2147483647, %v127
    %v130 = vlog2.pop %v128
    %v131 = vmul.f32 %v130, 0.6931472
    %v132 = vlog2.pop %v129
    %v133 = vmul.f32 %v132, 0.6931472
    %134 = vst [vmem:[#allocation7] sm:$0x77] %v116
    %135 = vst [vmem:[#allocation7 + $0x8] sm:$0x7] %v117
    %v139 = vunpack.c.l.s4 1966171168
    %v140 = vunpack.c.0.s8 %v139
    %v141 = vlaneseq
    %v142 = vshrl.u32 %v141, 7
    %v143 = vsub.s32 %v140, %v142
    %v144 = vrot.slane %v131, %v143
    %v146 = vunpack.c.l.s4 1966171168
    %v147 = vunpack.c.0.s8 %v146
    %v148 = vlaneseq
    %v149 = vshrl.u32 %v148, 7
    %v150 = vsub.s32 %v147, %v149
    %v151 = vrot.slane %v133, %v150
    %v152 = vcombine.low %v144, %v151
    %v154 = vunpack.c.l.s4 1966171168
    %v155 = vunpack.c.0.s8 %v154
    %v156 = vlaneseq
    %v157 = vshrl.u32 %v156, 7
    %v158 = vsub.s32 %v155, %v157
    %v159 = vrot.slane %v152, %v158
    %v161 = vlaneseq
    %vm162 = vcmp.ge.s32.totalorder %v161, 0
    %vm163 = vcmp.lt.s32.totalorder %v161, 384
    %vm164 = vmand %vm162, %vm163
    %s165 = scalar_lea.vmem [#allocation7], 3
    %166 = vst.msk [vmem:[%s165] ss:$4 sm:$0x7] %vm164, %v159
    // Predicated region
    $region26: #{tpu_custom_call.1} parent=1 // pred_check
      _
    $region27: #{tpu_custom_call.1} parent=1 // pred_check_branch
      %168 = sbr.rel (0) target = $region29
    $region28: #{tpu_custom_call.1} parent=1 // pred_region
      %s170 = ssub.s32 192, 192
      %171 = vsyncadd [#allocation5], %s170
      %s173 = sshll.u32 [#allocation7], 4
      %s174 = int_to_ptr.vmem [resolvable:$true] %s173
      %176 = dma.vmem_to_hbm [thread:$0]  %s174, 192, %s5, [#allocation5]
    $region29: #{tpu_custom_call.1} parent=1 // pred_fallthru
      _
    // Predicated region
    $region30: #{tpu_custom_call.1} parent=1 // pred_check
      _
    $region31: #{tpu_custom_call.1} parent=1 // pred_check_branch
      %178 = sbr.rel (0) target = $region33
    $region32: #{tpu_custom_call.1} parent=1 // pred_region
      %179 = dma.done [#allocation5], 192
    $region33: #{tpu_custom_call.1} parent=1 // pred_fallthru
      _
    %180 = vsyncpa [#allocation5], 1
    %181 = vsyncpa [#allocation6], 1

</llo_original>
